<compile_context>
chip_gen: v7x
topology: tpu7x:2x2x1
jax: 0.10.0
libtpu: 0.0.40
codegen_flags: <defaults>
</compile_context>

<pallas_src>
import jax
import jax.numpy as jnp
from jax.experimental import pallas as pl
from jax.experimental.pallas import tpu as pltpu

_LANE = 128  # vreg lane width / MXU column granularity


def _round_up(n, m):
    return ((n + m - 1) // m) * m


def _pick_batch_tile(batch):
    """Largest multiple-of-8 divisor of `batch`, capped at 512 and at batch//2
    (when batch >= 16) so the 1-D parallel grid has >= 2 steps to shard across
    v7x's two TensorCores."""
    if batch % 8 != 0:
        return batch  # tiny/ragged batch: single full-block grid step
    cap = min(512, batch)
    if batch >= 16:
        cap = min(cap, batch // 2)
    tile = 8
    for cand in range(8, cap + 1, 8):
        if batch % cand == 0:
            tile = cand
    return tile


def _vmem_cap_bytes():
    """Per-chip scoped-VMEM cap, leaving ~20% headroom for compiler scratch."""
    phys = 64 << 20  # conservative default (v7x per-TensorCore physical VMEM)
    try:
        info = pltpu.get_tpu_info()
        cap_attr = getattr(info, "vmem_capacity_bytes", None)
        if cap_attr:
            phys = int(cap_attr)
    except Exception:
        pass  # capability probe only; keep the conservative default
    return max(int(phys * 0.8), 32 << 20)


def _make_gating_kernel(num_layers, widths, total_padded, compute_dtype):
    """Fused chain of Linear layers writing into one packed output slab.

    Ref order: x_ref, [w_0, b_0, ..., w_{L-1}, b_{L-1}], out_ref
    Weights are stored (in, out) (transposed from torch's nn.Linear), biases (1, out).
    """
    total = sum(widths)

    def kernel(*refs):
        x_ref = refs[0]
        wb_refs = refs[1:1 + 2 * num_layers]
        out_ref = refs[1 + 2 * num_layers]

        h = x_ref[...]
        col = 0
        for li in range(num_layers):
            w = wb_refs[2 * li][...]
            b = wb_refs[2 * li + 1][...]
            lhs = h if h.dtype == compute_dtype else h.astype(compute_dtype)
            rhs = w if w.dtype == compute_dtype else w.astype(compute_dtype)
            h = jnp.dot(lhs, rhs, preferred_element_type=jnp.float32)
            h = h + b.astype(jnp.float32)
            wd = widths[li]
            out_ref[:, col:col + wd] = h.astype(out_ref.dtype)
            col += wd
        if total < total_padded:
            out_ref[:, total:total_padded] = jnp.zeros(
                (out_ref.shape[0], total_padded - total), out_ref.dtype)

    return kernel


def prepare_params(params, *, compute_dtype=jnp.float32):
    """One-time weight/bias prep (dtype cast, bias reshape) so the per-call path
    does zero HBM copies. Weights stay in their natural (in, out) layout."""
    ws = [jnp.asarray(w, compute_dtype) for w in params["w"]]
    bs = [jnp.asarray(b, jnp.float32).reshape(1, -1) for b in params["b"]]
    return ws, bs


def dlgn_fc_gating_forward(inp, params=None, *, prepared=None, batch_tile=None,
                           compute_dtype=jnp.float32, out_dtype=jnp.float32):
    """Fused forward of DLGN_FC_Gating_Network.

    inp:      (B, ...) float array; flattened to (B, D) like torch.flatten(inp, 1).
    params:   dict with lists 'w' (each (in_i, out_i)) and 'b' (each (1, out_i)).
    prepared: optional output of prepare_params() (preferred for repeated calls).
    compute_dtype=jnp.bfloat16 halves weight/x VMEM+DMA (opt-in; deviates from the
    f32 torch reference). Returns (layer_outs, final_out); final_out is layer_outs[-1].
    """
    if prepared is None:
        prepared = prepare_params(params, compute_dtype=compute_dtype)
    ws, bs = prepared

    B = inp.shape[0]
    x = inp.reshape(B, -1)
    if x.dtype != compute_dtype:
        x = x.astype(compute_dtype)
    D = x.shape[1]

    num_layers = len(ws)
    widths = [int(w.shape[1]) for w in ws]
    total = sum(widths)
    total_padded = _round_up(total, _LANE)

    if batch_tile is None:
        batch_tile = _pick_batch_tile(B)
    assert B % batch_tile == 0, "batch must divide evenly into batch_tile"

    kernel = _make_gating_kernel(num_layers, widths, total_padded, compute_dtype)

    operands = [x]
    for w, b in zip(ws, bs):
        operands.extend((w, b))

    x_bytes = jnp.dtype(x.dtype).itemsize
    param_bytes = jnp.dtype(ws[0].dtype).itemsize
    out_bytes = jnp.dtype(out_dtype).itemsize
    wsum = sum(int(w.size) + int(b.size) for w, b in zip(ws, bs))
    act_w = max([D] + widths)
    cap = _vmem_cap_bytes()

    # TODO(synk): if resident weights (wsum * param_bytes) ever approach `cap`, add a
    # second 'arbitrary' grid axis (or emit_pipeline over layers) that streams one
    # layer's weights at a time instead of keeping them all VMEM-resident.

    def vmem_limit(weight_bufs):
        budget = 2 * batch_tile * D * x_bytes                 # x tile (double-buffered)
        budget += 2 * batch_tile * total_padded * out_bytes   # output slab tile
        budget += weight_bufs * wsum * param_bytes            # resident weights/biases
        budget += 2 * batch_tile * act_w * 4                  # f32 activation temporaries
        return min(max(int(1.5 * budget) + (2 << 20), 16 << 20), cap)

    def build(single_buffer_weights):
        in_specs = [pl.BlockSpec((batch_tile, D), lambda i: (i, 0))]
        for w, b in zip(ws, bs):
            for arr in (w, b):
                if single_buffer_weights:
                    spec = pl.BlockSpec(arr.shape, lambda i: (0, 0),
                                        pipeline_mode=pl.Buffered(1))
                else:
                    spec = pl.BlockSpec(arr.shape, lambda i: (0, 0))
                in_specs.append(spec)
        out_specs = pl.BlockSpec((batch_tile, total_padded), lambda i: (i, 0))
        out_shape = jax.ShapeDtypeStruct((B, total_padded), out_dtype)

        return pl.pallas_call(
            kernel,
            out_shape=out_shape,
            grid_spec=pltpu.PrefetchScalarGridSpec(
                num_scalar_prefetch=0,
                grid=(B // batch_tile,),
                in_specs=in_specs,
                out_specs=out_specs,
            ),
            compiler_params=pltpu.CompilerParams(
                dimension_semantics=("parallel",),
                vmem_limit_bytes=vmem_limit(1 if single_buffer_weights else 2),
            ),
        )

    try:
        packed = build(single_buffer_weights=True)(*operands)
    except (TypeError, ValueError, NotImplementedError, pltpu.LoweringException):
        # pl.Buffered(1) unsupported on this jax build: fall back to default
        # double-buffered weight specs; vmem_limit re-sized for 2x weight buffers.
        # (A genuine shape/lowering bug re-raises identically from this build too.)
        packed = build(single_buffer_weights=False)(*operands)

    offs, off = [], 0
    for wd in widths:
        offs.append(off)
        off += wd
    layer_outs = [packed[:, o:o + wd] for o, wd in zip(offs, widths)]
    return layer_outs, layer_outs[-1]


def init_params(key, input_size, nodes_in_each_layer_list):
    """nn.Linear-style init: U(-1/sqrt(fan_in), 1/sqrt(fan_in)) for weight and bias.

    Weights stored (in, out), i.e. transposed from torch's (out, in) layout.
    """
    params = {"w": [], "b": []}
    prev = input_size
    for h in nodes_in_each_layer_list:
        bound = 1.0 / (prev ** 0.5)
        key, kw, kb = jax.random.split(key, 3)
        params["w"].append(jax.random.uniform(kw, (prev, h), jnp.float32, -bound, bound))
        params["b"].append(jax.random.uniform(kb, (1, h), jnp.float32, -bound, bound))
        prev = h
    return params


def dlgn_fc_gating_forward_ref(inp, params):
    """Pure-JAX reference mirroring the torch module's forward."""
    B = inp.shape[0]
    h = inp.reshape(B, -1).astype(jnp.float32)
    outs = []
    for w, b in zip(params["w"], params["b"]):
        h = h @ w + b
        outs.append(h)
    return outs, h


if __name__ == "__main__":
    # Small config consistent with the module: 16x16 inputs (D=256), two hidden layers.
    # B=32 -> batch_tile=16, grid=(2,) so the parallel axis actually has >1 step.
    B, H, W = 32, 16, 16
    nodes_in_each_layer_list = [32, 32]

    key = jax.random.PRNGKey(0)
    key, kin = jax.random.split(key)
    inp = jax.random.normal(kin, (B, H, W), jnp.float32)

    params = init_params(key, H * W, nodes_in_each_layer_list)
    prepared = prepare_params(params)     # one-time prep; reuse across calls

    layer_outs, final_out = dlgn_fc_gating_forward(inp, prepared=prepared)
    layer_outs = jax.block_until_ready(layer_outs)
    final_out = jax.block_until_ready(final_out)

    ref_outs, ref_final = dlgn_fc_gating_forward_ref(inp, params)
    assert len(layer_outs) == len(nodes_in_each_layer_list)
    for got, want, width in zip(layer_outs, ref_outs, nodes_in_each_layer_list):
        assert got.shape == (B, width)
        assert jnp.allclose(got, want, atol=1e-4, rtol=1e-4), "layer output mismatch"
    assert final_out.shape == (B, nodes_in_each_layer_list[-1])
    assert jnp.allclose(final_out, ref_final, atol=1e-4, rtol=1e-4), "final output mismatch"

    print("KERNEL_OK")
</pallas_src>

<mosaic_0001>
module attributes {stable_mosaic.version = 11 : i64} {
  func.func @kernel(%arg0: i32, %arg1: memref<16x256xf32, #tpu.memory_space<vmem>>, %arg2: memref<256x32xf32, #tpu.memory_space<vmem>>, %arg3: memref<1x32xf32, #tpu.memory_space<vmem>>, %arg4: memref<32x32xf32, #tpu.memory_space<vmem>>, %arg5: memref<1x32xf32, #tpu.memory_space<vmem>>, %arg6: memref<16x128xf32, #tpu.memory_space<vmem>>) attributes {dimension_semantics = [#tpu.dimension_semantics<parallel>], iteration_bounds = array<i64: 2>, scalar_prefetch = 0 : i64, scratch_operands = 0 : i64, tpu.core_type = #tpu.core_type<tc>, window_params = [{transform_indices = @transform_0, window_bounds = array<i64: 16, 256>}, {pipeline_mode = #tpu.pipeline_mode<synchronous>, transform_indices = @transform_1, window_bounds = array<i64: 256, 32>}, {pipeline_mode = #tpu.pipeline_mode<synchronous>, transform_indices = @transform_2, window_bounds = array<i64: 1, 32>}, {pipeline_mode = #tpu.pipeline_mode<synchronous>, transform_indices = @transform_3, window_bounds = array<i64: 32, 32>}, {pipeline_mode = #tpu.pipeline_mode<synchronous>, transform_indices = @transform_4, window_bounds = array<i64: 1, 32>}, {transform_indices = @transform_5, window_bounds = array<i64: 16, 128>}]} {
    %c0 = arith.constant 0 : index
    %c0_0 = arith.constant 0 : index
    %0 = vector.load %arg1[%c0, %c0_0] : memref<16x256xf32, #tpu.memory_space<vmem>>, vector<16x256xf32>
    %c0_1 = arith.constant 0 : index
    %c0_2 = arith.constant 0 : index
    %1 = vector.load %arg2[%c0_1, %c0_2] : memref<256x32xf32, #tpu.memory_space<vmem>>, vector<256x32xf32>
    %c0_3 = arith.constant 0 : index
    %c0_4 = arith.constant 0 : index
    %2 = vector.load %arg3[%c0_3, %c0_4] : memref<1x32xf32, #tpu.memory_space<vmem>>, vector<1x32xf32>
    %cst = arith.constant dense<0.000000e+00> : vector<16x32xf32>
    %3 = tpu.matmul %0, %1, %cst {dimension_numbers = #tpu.dot_dimension_numbers<[1], [0], [0], [1], [0, 0, 1, 1], [], []>} : vector<16x256xf32>, vector<256x32xf32>, vector<16x32xf32> -> vector<16x32xf32>
    %4 = vector.broadcast %2 : vector<1x32xf32> to vector<16x32xf32>
    %5 = arith.addf %3, %4 : vector<16x32xf32>
    %c0_5 = arith.constant 0 : index
    %c0_6 = arith.constant 0 : index
    %6 = vector.load %arg6[%c0_5, %c0_6] : memref<16x128xf32, #tpu.memory_space<vmem>>, vector<16x32xf32>
    tpu.vector_store %arg6[%c0_5, %c0_6], %5 {strides = array<i32>} : memref<16x128xf32, #tpu.memory_space<vmem>>, vector<16x32xf32>,
    %c0_7 = arith.constant 0 : index
    %c0_8 = arith.constant 0 : index
    %7 = vector.load %arg4[%c0_7, %c0_8] : memref<32x32xf32, #tpu.memory_space<vmem>>, vector<32x32xf32>
    %c0_9 = arith.constant 0 : index
    %c0_10 = arith.constant 0 : index
    %8 = vector.load %arg5[%c0_9, %c0_10] : memref<1x32xf32, #tpu.memory_space<vmem>>, vector<1x32xf32>
    %cst_11 = arith.constant dense<0.000000e+00> : vector<16x32xf32>
    %9 = tpu.matmul %5, %7, %cst_11 {dimension_numbers = #tpu.dot_dimension_numbers<[1], [0], [0], [1], [0, 0, 1, 1], [], []>} : vector<16x32xf32>, vector<32x32xf32>, vector<16x32xf32> -> vector<16x32xf32>
    %10 = vector.broadcast %8 : vector<1x32xf32> to vector<16x32xf32>
    %11 = arith.addf %9, %10 : vector<16x32xf32>
    %c0_12 = arith.constant 0 : index
    %c32 = arith.constant 32 : index
    %12 = vector.load %arg6[%c0_12, %c32] : memref<16x128xf32, #tpu.memory_space<vmem>>, vector<16x32xf32>
    tpu.vector_store %arg6[%c0_12, %c32], %11 {strides = array<i32>} : memref<16x128xf32, #tpu.memory_space<vmem>>, vector<16x32xf32>,
    %cst_13 = arith.constant 0.000000e+00 : f32
    %13 = vector.broadcast %cst_13 : f32 to vector<16x64xf32>
    %c0_14 = arith.constant 0 : index
    %c64 = arith.constant 64 : index
    %14 = vector.load %arg6[%c0_14, %c64] : memref<16x128xf32, #tpu.memory_space<vmem>>, vector<16x64xf32>
    tpu.vector_store %arg6[%c0_14, %c64], %13 {strides = array<i32>} : memref<16x128xf32, #tpu.memory_space<vmem>>, vector<16x64xf32>,
    return
  }
  func.func @transform_0(%arg0: i32) -> (i32, i32) {
    %c0_i32 = arith.constant 0 : i32
    %c0_i32_0 = arith.constant 0 : i32
    return %arg0, %c0_i32 : i32, i32
  }
  func.func @transform_1(%arg0: i32) -> (i32, i32) {
    %c0_i32 = arith.constant 0 : i32
    %c0_i32_0 = arith.constant 0 : i32
    %c0_i32_1 = arith.constant 0 : i32
    return %c0_i32, %c0_i32_0 : i32, i32
  }
  func.func @transform_2(%arg0: i32) -> (i32, i32) {
    %c0_i32 = arith.constant 0 : i32
    %c0_i32_0 = arith.constant 0 : i32
    %c0_i32_1 = arith.constant 0 : i32
    return %c0_i32, %c0_i32_0 : i32, i32
  }
  func.func @transform_3(%arg0: i32) -> (i32, i32) {
    %c0_i32 = arith.constant 0 : i32
    %c0_i32_0 = arith.constant 0 : i32
    %c0_i32_1 = arith.constant 0 : i32
    return %c0_i32, %c0_i32_0 : i32, i32
  }
  func.func @transform_4(%arg0: i32) -> (i32, i32) {
    %c0_i32 = arith.constant 0 : i32
    %c0_i32_0 = arith.constant 0 : i32
    %c0_i32_1 = arith.constant 0 : i32
    return %c0_i32, %c0_i32_0 : i32, i32
  }
  func.func @transform_5(%arg0: i32) -> (i32, i32) {
    %c0_i32 = arith.constant 0 : i32
    %c0_i32_0 = arith.constant 0 : i32
    return %arg0, %c0_i32 : i32, i32
  }
}

</mosaic_0001>

<llo_original>
// kernel: tpu_custom_call.1
$region0: #{tpu_custom_call.1}
  #allocation0 [shape = 'u32[]', space=smem, size = 0x4, offset = 0x4, fixed_abs, tag = 'smem constant byte address 0x4 - core index']
  #allocation1 [shape = 'u32[144,128]{1,0:T(1,128)}', space=vmem, size = 0x12000, scoped, tag = 'internal scratch']
  %s0 = inlined_call_operand.vmem [shape: f32[32,256], index: 0, kind: input, shape index: {}]
  %s1 = inlined_call_operand.vmem [shape: f32[256,32], index: 1, kind: input, shape index: {}]
  %s2 = inlined_call_operand.vmem [shape: f32[1,32], index: 2, kind: input, shape index: {}]
  %s3 = inlined_call_operand.vmem [shape: f32[32,32], index: 3, kind: input, shape index: {}]
  %s4 = inlined_call_operand.vmem [shape: f32[1,32], index: 4, kind: input, shape index: {}]
  %s5 = inlined_call_operand.hbm [shape: f32[32,128], index: 5, kind: output, shape index: {}]
  %s6 = sld [smem:[#allocation0]]
  $region53: #{tpu_custom_call.1} parent=0
    _
  %s8 = ssub.s32 1, %s6
  %s9 = scalar_select 0, %s8, %s6
  $region1: #{tpu_custom_call.1} parent=0
    #allocation2 [shape = 'u8[16384]{0}', space=vmem, size = 0x4000, scoped, tag = 'output window, operand 0']
    #allocation3 [shape = 's32[2]{0}', space=sflag, size = 0x8, scoped, tag = 'scoped memory for tpu_custom_call.1']
    %10 = vsyncpa [#allocation3], 0
    %s11 = scalar_lea.sflag [#allocation3], 1
    %12 = vsyncpa %s11, 0
    loop: start=0, step=1, limit=4
    $region2: #{tpu_custom_call.1} parent=1 // loop_pre_header
      _
    $region3: #{tpu_custom_call.1} parent=1 // loop_header
      %s14 = sphi 0, %s18
      %p15 = scmp.ge.s32.totalorder %s14, 4
      %s24 = sphi 0, %s26
      %s27 = sphi 0, %s24
      %s28 = sphi 0, %s27
      %s44 = sphi 0, %s28
      %s48 = sphi 0, %s48
      %s50 = sphi 0, %s48
      %s51 = sphi 0, %s50
      %s65 = sphi 0, %s51
      %s69 = sphi 0, %s69
      %s71 = sphi 0, %s69
      %s72 = sphi 0, %s71
      %s86 = sphi 0, %s72
      %s90 = sphi 0, %s90
      %s92 = sphi 0, %s90
      %s93 = sphi 0, %s92
      %s107 = sphi 0, %s93
      %s111 = sphi 0, %s111
      %s113 = sphi 0, %s111
      %s114 = sphi 0, %s113
      %s128 = sphi 0, %s114
      %s134 = sphi 0, %s136
      %s137 = sphi 0, %s134
      %s138 = sphi 0, %s137
      %s154 = sphi 0, %s138
    $region4: #{tpu_custom_call.1} parent=1 // loop_header_branch
      %17 = sbr.rel (%p15) target = $region8
    $region5: #{tpu_custom_call.1} parent=1 // loop_body
      %s19 = ssub.s32 %s14, 1
      %s20 = ssub.s32 %s14, 2
      %s21 = sadd.s32 %s14, 1
      %s22 = ssub.s32 %s14, %s21
      %p23 = scmp.eq.s32.totalorder %s22, 0
      %s25 = sadd.s32 %s24, 1
      %s26 = scalar_select %p23, %s24, %s25
      %p29 = pneg %p23
      %p30 = scmp.eq.s32.totalorder %s14, 1
      %p31 = por %p29, %p30
      %p32 = scmp.ne.s32.totalorder %s24, %s27
      %p33 = scmp.eq.s32.totalorder %s14, 0
      %p34 = por %p32, %p33
      %p35 = scmp.ne.s32.totalorder %s24, %s27
      %p36 = scmp.eq.s32.totalorder %s19, 1
      %p37 = por %p35, %p36
      %p38 = scmp.ne.s32.totalorder %s27, %s28
      %p39 = scmp.eq.s32.totalorder %s19, 0
      %p40 = por %p38, %p39
      %p41 = scmp.ne.s32.totalorder %s27, %s28
      %p42 = scmp.eq.s32.totalorder %s20, 1
      %p43 = por %p41, %p42
      %p45 = scmp.ne.s32.totalorder %s28, %s44
      %p46 = scmp.eq.s32.totalorder %s20, 0
      %p47 = por %p45, %p46
      %s49 = sadd.s32 %s48, 1
      %p52 = scmp.eq.s32.totalorder %s14, 1
      %p53 = scmp.ne.s32.totalorder %s48, %s50
      %p54 = scmp.eq.s32.totalorder %s14, 0
      %p55 = por %p53, %p54
      %p56 = scmp.ne.s32.totalorder %s48, %s50
      %p57 = scmp.eq.s32.totalorder %s19, 1
      %p58 = por %p56, %p57
      %p59 = scmp.ne.s32.totalorder %s50, %s51
      %p60 = scmp.eq.s32.totalorder %s19, 0
      %p61 = por %p59, %p60
      %p62 = scmp.ne.s32.totalorder %s50, %s51
      %p63 = scmp.eq.s32.totalorder %s20, 1
      %p64 = por %p62, %p63
      %p66 = scmp.ne.s32.totalorder %s51, %s65
      %p67 = scmp.eq.s32.totalorder %s20, 0
      %p68 = por %p66, %p67
      %s70 = sadd.s32 %s69, 1
      %p73 = scmp.eq.s32.totalorder %s14, 1
      %p74 = scmp.ne.s32.totalorder %s69, %s71
      %p75 = scmp.eq.s32.totalorder %s14, 0
      %p76 = por %p74, %p75
      %p77 = scmp.ne.s32.totalorder %s69, %s71
      %p78 = scmp.eq.s32.totalorder %s19, 1
      %p79 = por %p77, %p78
      %p80 = scmp.ne.s32.totalorder %s71, %s72
      %p81 = scmp.eq.s32.totalorder %s19, 0
      %p82 = por %p80, %p81
      %p83 = scmp.ne.s32.totalorder %s71, %s72
      %p84 = scmp.eq.s32.totalorder %s20, 1
      %p85 = por %p83, %p84
      %p87 = scmp.ne.s32.totalorder %s72, %s86
      %p88 = scmp.eq.s32.totalorder %s20, 0
      %p89 = por %p87, %p88
      %s91 = sadd.s32 %s90, 1
      %p94 = scmp.eq.s32.totalorder %s14, 1
      %p95 = scmp.ne.s32.totalorder %s90, %s92
      %p96 = scmp.eq.s32.totalorder %s14, 0
      %p97 = por %p95, %p96
      %p98 = scmp.ne.s32.totalorder %s90, %s92
      %p99 = scmp.eq.s32.totalorder %s19, 1
      %p100 = por %p98, %p99
      %p101 = scmp.ne.s32.totalorder %s92, %s93
      %p102 = scmp.eq.s32.totalorder %s19, 0
      %p103 = por %p101, %p102
      %p104 = scmp.ne.s32.totalorder %s92, %s93
      %p105 = scmp.eq.s32.totalorder %s20, 1
      %p106 = por %p104, %p105
      %p108 = scmp.ne.s32.totalorder %s93, %s107
      %p109 = scmp.eq.s32.totalorder %s20, 0
      %p110 = por %p108, %p109
      %s112 = sadd.s32 %s111, 1
      %p115 = scmp.eq.s32.totalorder %s14, 1
      %p116 = scmp.ne.s32.totalorder %s111, %s113
      %p117 = scmp.eq.s32.totalorder %s14, 0
      %p118 = por %p116, %p117
      %p119 = scmp.ne.s32.totalorder %s111, %s113
      %p120 = scmp.eq.s32.totalorder %s19, 1
      %p121 = por %p119, %p120
      %p122 = scmp.ne.s32.totalorder %s113, %s114
      %p123 = scmp.eq.s32.totalorder %s19, 0
      %p124 = por %p122, %p123
      %p125 = scmp.ne.s32.totalorder %s113, %s114
      %p126 = scmp.eq.s32.totalorder %s20, 1
      %p127 = por %p125, %p126
      %p129 = scmp.ne.s32.totalorder %s114, %s128
      %p130 = scmp.eq.s32.totalorder %s20, 0
      %p131 = por %p129, %p130
      %s132 = ssub.s32 %s14, %s21
      %p133 = scmp.eq.s32.totalorder %s132, 0
      %s135 = sadd.s32 %s134, 1
      %s136 = scalar_select %p133, %s134, %s135
      %p139 = pneg %p133
      %p140 = scmp.eq.s32.totalorder %s14, 1
      %p141 = por %p139, %p140
      %p142 = scmp.ne.s32.totalorder %s134, %s137
      %p143 = scmp.eq.s32.totalorder %s14, 0
      %p144 = por %p142, %p143
      %p145 = scmp.ne.s32.totalorder %s134, %s137
      %p146 = scmp.eq.s32.totalorder %s19, 1
      %p147 = por %p145, %p146
      %p148 = scmp.ne.s32.totalorder %s137, %s138
      %p149 = scmp.eq.s32.totalorder %s19, 0
      %p150 = por %p148, %p149
      %p151 = scmp.ne.s32.totalorder %s137, %s138
      %p152 = scmp.eq.s32.totalorder %s20, 1
      %p153 = por %p151, %p152
      %p155 = scmp.ne.s32.totalorder %s138, %s154
      %p156 = scmp.eq.s32.totalorder %s20, 0
      %p157 = por %p155, %p156
      %p158 = scmp.le.s32.totalorder 1, %s14
      %p159 = scmp.lt.s32.totalorder %s14, 3
      %p160 = pnand %p158, %p159
      %p161 = pneg %p160
      // Predicated region
      $region9: #{tpu_custom_call.1} parent=5 // pred_check
        _
      $region10: #{tpu_custom_call.1} parent=5 // pred_check_branch
        %163 = sbr.rel (%p160) target = $region12
      $region11: #{tpu_custom_call.1} parent=5 // pred_region
        %s164 = ssub.s32 %s14, 1
        // Predicated region
        $region13: #{tpu_custom_call.1} parent=11 // pred_check
          %p165 = pneg %p61
        $region14: #{tpu_custom_call.1} parent=11 // pred_check_branch
          %167 = sbr.rel (%p165) target = $region16
        $region15: #{tpu_custom_call.1} parent=11 // pred_region
          _
        $region16: #{tpu_custom_call.1} parent=11 // pred_fallthru
          _
        // Predicated region
        $region17: #{tpu_custom_call.1} parent=11 // pred_check
          %p168 = pneg %p82
        $region18: #{tpu_custom_call.1} parent=11 // pred_check_branch
          %170 = sbr.rel (%p168) target = $region20
        $region19: #{tpu_custom_call.1} parent=11 // pred_region
          _
        $region20: #{tpu_custom_call.1} parent=11 // pred_fallthru
          _
        // Predicated region
        $region21: #{tpu_custom_call.1} parent=11 // pred_check
          %p171 = pneg %p103
        $region22: #{tpu_custom_call.1} parent=11 // pred_check_branch
          %173 = sbr.rel (%p171) target = $region24
        $region23: #{tpu_custom_call.1} parent=11 // pred_region
          _
        $region24: #{tpu_custom_call.1} parent=11 // pred_fallthru
          _
        // Predicated region
        $region25: #{tpu_custom_call.1} parent=11 // pred_check
          %p174 = pneg %p124
        $region26: #{tpu_custom_call.1} parent=11 // pred_check_branch
          %176 = sbr.rel (%p174) target = $region28
        $region27: #{tpu_custom_call.1} parent=11 // pred_region
          _
        $region28: #{tpu_custom_call.1} parent=11 // pred_fallthru
          _
      $region12: #{tpu_custom_call.1} parent=5 // pred_fallthru
        _
      %p177 = scmp.lt.s32.totalorder %s14, 2
      // Predicated region
      $region29: #{tpu_custom_call.1} parent=5 // pred_check
        %p178 = pneg %p177
      $region30: #{tpu_custom_call.1} parent=5 // pred_check_branch
        %180 = sbr.rel (%p178) target = $region32
      $region31: #{tpu_custom_call.1} parent=5 // pred_region
        // Predicated region
        $region33: #{tpu_custom_call.1} parent=31 // pred_check
          %p181 = pneg %p34
        $region34: #{tpu_custom_call.1} parent=31 // pred_check_branch
          %183 = sbr.rel (%p181) target = $region36
        $region35: #{tpu_custom_call.1} parent=31 // pred_region
          %s184 = smul.u32 2, %s14
          %p185 = scmp.lt.s32.totalorder %s184, 3
          %s186 = scalar_select %p185, %s184, 3
          %s187 = smul.addr %s186, 2
          %s188 = smul.addr %s187, 8
          %s189 = scalar_lea.vmem %s0, %s188
          %s190 = smul.u32 2, %s14
        $region36: #{tpu_custom_call.1} parent=31 // pred_fallthru
          _
      $region32: #{tpu_custom_call.1} parent=5 // pred_fallthru
        _
      %p191 = scmp.le.s32.totalorder 1, %s14
      %p192 = scmp.lt.s32.totalorder %s14, 3
      %p193 = pnand %p191, %p192
      %p194 = pneg %p193
      // Predicated region
      $region37: #{tpu_custom_call.1} parent=5 // pred_check
        _
      $region38: #{tpu_custom_call.1} parent=5 // pred_check_branch
        %196 = sbr.rel (%p193) target = $region40
      $region39: #{tpu_custom_call.1} parent=5 // pred_region
        %s197 = ssub.s32 %s14, 1
        %s198 = smul.u32 2, %s19
        %p199 = scmp.lt.s32.totalorder %s198, 3
        %s200 = scalar_select %p199, %s198, 3
        %s201 = smul.addr %s200, 2
        %s202 = smul.addr %s201, 8
        %s203 = scalar_lea.vmem %s0, %s202
        %p204 = pneg %p40
        %p205 = pneg %p37
        %p206 = pneg %p61
        %p207 = pneg %p58
        %p208 = pneg %p82
        %p209 = pneg %p79
        %p210 = pneg %p103
        %p211 = pneg %p100
        %p212 = pneg %p124
        %p213 = pneg %p121
        %p214 = pneg %p150
        %p215 = pneg %p147
        %s216 = sand.u32 %s137, 1
        %s217 = scalar_lea.sflag [#allocation3], %s216
        %s218 = sand.u32 %s137, 1
        %s219 = smul.addr %s218, 16
        %s220 = scalar_lea.vmem [#allocation2], %s219
        %s221 = smul.u32 2, %s19
        %p222 = scmp.lt.s32.totalorder %s221, 3
        %s223 = scalar_select %p222, %s221, 3
        %s224 = smul.addr %s223, 2
        %s225 = smul.addr %s224, 8
        %s226 = scalar_lea.vmem %s0, %s225
        %s227 = smul.u32 2, %s19
        %s228 = smul.u32 2, %s19
        %v229 = vld [vmem:[%s226] sm:$0xff]
        %v230 = vld [vmem:[%s226 + $0x8] sm:$0xff]
        %v231 = vld [vmem:[%s226 + $0x10] sm:$0xff]
        %v232 = vld [vmem:[%s226 + $0x18] sm:$0xff]
        %v233 = vld [vmem:[%s1] sm:$0xff]
        %v234 = vld [vmem:[%s1 + $0x8] sm:$0xff]
        %v235 = vld [vmem:[%s1 + $0x10] sm:$0xff]
        %v236 = vld [vmem:[%s1 + $0x18] sm:$0xff]
        %v237 = vld [vmem:[%s1 + $0x20] sm:$0xff]
        %v238 = vld [vmem:[%s1 + $0x28] sm:$0xff]
        %v239 = vld [vmem:[%s1 + $0x30] sm:$0xff]
        %v240 = vld [vmem:[%s1 + $0x38] sm:$0xff]
        %v241 = vld [vmem:[%s1 + $0x40] sm:$0xff]
        %v242 = vld [vmem:[%s1 + $0x48] sm:$0xff]
        %v243 = vld [vmem:[%s1 + $0x50] sm:$0xff]
        %v244 = vld [vmem:[%s1 + $0x58] sm:$0xff]
        %v245 = vld [vmem:[%s1 + $0x60] sm:$0xff]
        %v246 = vld [vmem:[%s1 + $0x68] sm:$0xff]
        %v247 = vld [vmem:[%s1 + $0x70] sm:$0xff]
        %v248 = vld [vmem:[%s1 + $0x78] sm:$0xff]
        %v249 = vld [vmem:[%s1 + $0x80] sm:$0xff]
        %v250 = vld [vmem:[%s1 + $0x88] sm:$0xff]
        %v251 = vld [vmem:[%s1 + $0x90] sm:$0xff]
        %v252 = vld [vmem:[%s1 + $0x98] sm:$0xff]
        %v253 = vld [vmem:[%s1 + $0xa0] sm:$0xff]
        %v254 = vld [vmem:[%s1 + $0xa8] sm:$0xff]
        %v255 = vld [vmem:[%s1 + $0xb0] sm:$0xff]
        %v256 = vld [vmem:[%s1 + $0xb8] sm:$0xff]
        %v257 = vld [vmem:[%s1 + $0xc0] sm:$0xff]
        %v258 = vld [vmem:[%s1 + $0xc8] sm:$0xff]
        %v259 = vld [vmem:[%s1 + $0xd0] sm:$0xff]
        %v260 = vld [vmem:[%s1 + $0xd8] sm:$0xff]
        %v261 = vld [vmem:[%s1 + $0xe0] sm:$0xff]
        %v262 = vld [vmem:[%s1 + $0xe8] sm:$0xff]
        %v263 = vld [vmem:[%s1 + $0xf0] sm:$0xff]
        %v264 = vld [vmem:[%s1 + $0xf8] sm:$0xff]
        %v265 = vld [vmem:[%s2] sm:$0x1]
        %v267 = vlaneseq
        %v268 = vshrl.u32 %v267, 7
        %v269 = vsub.s32 0, %v268
        %v270 = vrot.slane %v265, %v269
        %272 = vmatprep.subr.mxu0 0.0
        %273 = vmatpush1.msra.mxu0 %v233
        %274 = vmatprep.subr.mxu0 0.0
        %275 = vmatpush1.msra.mxu0 %v234
        %276 = vmatprep.subr.mxu0 0.0
        %277 = vmatpush1.msra.mxu0 %v235
        %278 = vmatprep.subr.mxu0 0.0
        %279 = vmatpush1.msra.mxu0 %v236
        %280 = vmatprep.subr.mxu0 0.0
        %281 = vmatpush1.msra.mxu0 %v237
        %282 = vmatprep.subr.mxu0 0.0
        %283 = vmatpush1.msra.mxu0 %v238
        %284 = vmatprep.subr.mxu0 0.0
        %285 = vmatpush1.msra.mxu0 %v239
        %286 = vmatprep.subr.mxu0 0.0
        %287 = vmatpush1.msra.mxu0 %v240
        %288 = vmatprep.subr.mxu0 0.0
        %289 = vmatpush1.msra.mxu0 %v241
        %290 = vmatprep.subr.mxu0 0.0
        %291 = vmatpush1.msra.mxu0 %v242
        %292 = vmatprep.subr.mxu0 0.0
        %293 = vmatpush1.msra.mxu0 %v243
        %294 = vmatprep.subr.mxu0 0.0
        %295 = vmatpush1.msra.mxu0 %v244
        %296 = vmatprep.subr.mxu0 0.0
        %297 = vmatpush1.msra.mxu0 %v245
        %298 = vmatprep.subr.mxu0 0.0
        %299 = vmatpush1.msra.mxu0 %v246
        %300 = vmatprep.subr.mxu0 0.0
        %301 = vmatpush1.msra.mxu0 %v247
        %302 = vmatprep.subr.mxu0 0.0
        %303 = vmatpush1.msra.mxu0 %v248
        %304 = vmatprep.subr.mxu0 0.0
        %305 = vmatpush1.msra.mxu0 %v249
        %306 = vmatprep.subr.mxu0 0.0
        %307 = vmatpush1.msra.mxu0 %v250
        %308 = vmatprep.subr.mxu0 0.0
        %309 = vmatpush1.msra.mxu0 %v251
        %310 = vmatprep.subr.mxu0 0.0
        %311 = vmatpush1.msra.mxu0 %v252
        %312 = vmatprep.subr.mxu0 0.0
        %313 = vmatpush1.msra.mxu0 %v253
        %314 = vmatprep.subr.mxu0 0.0
        %315 = vmatpush1.msra.mxu0 %v254
        %316 = vmatprep.subr.mxu0 0.0
        %317 = vmatpush1.msra.mxu0 %v255
        %318 = vmatprep.subr.mxu0 0.0
        %319 = vmatpush1.msra.mxu0 %v256
        %320 = vmatprep.subr.mxu0 0.0
        %321 = vmatpush1.msra.mxu0 %v257
        %322 = vmatprep.subr.mxu0 0.0
        %323 = vmatpush1.msra.mxu0 %v258
        %324 = vmatprep.subr.mxu0 0.0
        %325 = vmatpush1.msra.mxu0 %v259
        %326 = vmatprep.subr.mxu0 0.0
        %327 = vmatpush1.msra.mxu0 %v260
        %328 = vmatprep.subr.mxu0 0.0
        %329 = vmatpush1.msra.mxu0 %v261
        %330 = vmatprep.subr.mxu0 0.0
        %331 = vmatpush1.msra.mxu0 %v262
        %332 = vmatprep.subr.mxu0 0.0
        %333 = vmatpush1.msra.mxu0 %v263
        %334 = vmatprep.subr.mxu0 0.0
        %335 = vmatpush1.msra.mxu0 %v264
        %336 = vmatprep.mubr.f32.mxu0 %v230
        %337 = vmatmul.mubr.f32.gmra.mrb[0].mxu0 %v229
        %v338 = vpop.f32.mrb[0].mxu0
        %v339 = vadd.f32 %v270, %v338
        %v340 = vpop.f32.mrb[0].mxu0
        %341 = vmatprep.mubr.f32.mxu0 %v232
        %342 = vmatmul.mubr.f32.gmra.mrb[0].mxu0 %v231
        %v343 = vpop.f32.mrb[0].mxu0
        %v344 = vadd.f32 %v270, %v343
        %v345 = vpop.f32.mrb[0].mxu0
        %346 = vdwg.mxu0
        %vm347 = vcmask 261120
        %348 = vst.msk [vmem:[%s220] sm:$0xff] %vm347, %v339
        %349 = vst.msk [vmem:[%s220 + $0x8] sm:$0xff] %vm347, %v344
        %v350 = vld [vmem:[%s3] sm:$0xff]
        %v351 = vld [vmem:[%s3 + $0x8] sm:$0xff]
        %v352 = vld [vmem:[%s3 + $0x10] sm:$0xff]
        %v353 = vld [vmem:[%s3 + $0x18] sm:$0xff]
        %v354 = vld [vmem:[%s4] sm:$0x1]
        %v356 = vlaneseq
        %v357 = vshrl.u32 %v356, 7
        %v358 = vsub.s32 0, %v357
        %v359 = vrot.slane %v354, %v358
        %v362 = vsel %vm347, %v339, 0
        %v365 = vsel %vm347, %v344, 0
        %367 = vmatprep.subr.mxu0 0.0
        %368 = vmatpush1.msra.mxu0 %v350
        %369 = vmatprep.subr.mxu0 0.0
        %370 = vmatpush1.msra.mxu0 %v351
        %371 = vmatprep.subr.mxu0 0.0
        %372 = vmatpush1.msra.mxu0 %v352
        %373 = vmatprep.subr.mxu0 0.0
        %374 = vmatpush1.msra.mxu0 %v353
        %375 = vmatprep.subr.mxu0 0.0
        %376 = vmatpush1.msra.mxu0 0.0
        %377 = vmatprep.subr.mxu0 0.0
        %378 = vmatpush1.msra.mxu0 0.0
        %379 = vmatprep.subr.mxu0 0.0
        %380 = vmatpush1.msra.mxu0 0.0
        %381 = vmatprep.subr.mxu0 0.0
        %382 = vmatpush1.msra.mxu0 0.0
        %383 = vmatprep.subr.mxu0 0.0
        %384 = vmatpush1.msra.mxu0 0.0
        %385 = vmatprep.subr.mxu0 0.0
        %386 = vmatpush1.msra.mxu0 0.0
        %387 = vmatprep.subr.mxu0 0.0
        %388 = vmatpush1.msra.mxu0 0.0
        %389 = vmatprep.subr.mxu0 0.0
        %390 = vmatpush1.msra.mxu0 0.0
        %391 = vmatprep.subr.mxu0 0.0
        %392 = vmatpush1.msra.mxu0 0.0
        %393 = vmatprep.subr.mxu0 0.0
        %394 = vmatpush1.msra.mxu0 0.0
        %395 = vmatprep.subr.mxu0 0.0
        %396 = vmatpush1.msra.mxu0 0.0
        %397 = vmatprep.subr.mxu0 0.0
        %398 = vmatpush1.msra.mxu0 0.0
        %399 = vmatprep.subr.mxu0 0.0
        %400 = vmatpush1.msra.mxu0 0.0
        %401 = vmatprep.subr.mxu0 0.0
        %402 = vmatpush1.msra.mxu0 0.0
        %403 = vmatprep.subr.mxu0 0.0
        %404 = vmatpush1.msra.mxu0 0.0
        %405 = vmatprep.subr.mxu0 0.0
        %406 = vmatpush1.msra.mxu0 0.0
        %407 = vmatprep.subr.mxu0 0.0
        %408 = vmatpush1.msra.mxu0 0.0
        %409 = vmatprep.subr.mxu0 0.0
        %410 = vmatpush1.msra.mxu0 0.0
        %411 = vmatprep.subr.mxu0 0.0
        %412 = vmatpush1.msra.mxu0 0.0
        %413 = vmatprep.subr.mxu0 0.0
        %414 = vmatpush1.msra.mxu0 0.0
        %415 = vmatprep.subr.mxu0 0.0
        %416 = vmatpush1.msra.mxu0 0.0
        %417 = vmatprep.subr.mxu0 0.0
        %418 = vmatpush1.msra.mxu0 0.0
        %419 = vmatprep.subr.mxu0 0.0
        %420 = vmatpush1.msra.mxu0 0.0
        %421 = vmatprep.subr.mxu0 0.0
        %422 = vmatpush1.msra.mxu0 0.0
        %423 = vmatprep.subr.mxu0 0.0
        %424 = vmatpush1.msra.mxu0 0.0
        %425 = vmatprep.subr.mxu0 0.0
        %426 = vmatpush1.msra.mxu0 0.0
        %427 = vmatprep.subr.mxu0 0.0
        %428 = vmatpush1.msra.mxu0 0.0
        %429 = vmatprep.subr.mxu0 0.0
        %430 = vmatpush1.msra.mxu0 0.0
        %431 = vmatprep.mubr.f32.mxu0 0.0
        %432 = vmatmul.mubr.f32.gmra.mrb[0].mxu0 %v362
        %v433 = vpop.f32.mrb[0].mxu0
        %v434 = vadd.f32 %v359, %v433
        %v435 = vpop.f32.mrb[0].mxu0
        %436 = vmatprep.mubr.f32.mxu0 0.0
        %437 = vmatmul.mubr.f32.gmra.mrb[0].mxu0 %v365
        %v438 = vpop.f32.mrb[0].mxu0
        %v439 = vadd.f32 %v359, %v438
        %v440 = vpop.f32.mrb[0].mxu0
        %441 = vdwg.mxu0
        %444 = vrot.lane.b32.xlu0 %v434, 32
        %v445 = vpop.permute.xlu0 %444
        %446 = vrot.lane.b32.xlu0 %v439, 32
        %v447 = vpop.permute.xlu0 %446
        %vm450 = vcmask 523520
        %451 = vst.msk [vmem:[%s220] sm:$0xff] %vm450, %v445
        %452 = vst.msk [vmem:[%s220 + $0x8] sm:$0xff] %vm450, %v447
        %vm453 = vcmask 1048064
        %454 = vst.msk [vmem:[%s220] sm:$0xff] %vm453, 0.0
        %455 = vst.msk [vmem:[%s220 + $0x8] sm:$0xff] %vm453, 0.0
        %s456 = sand.u32 %s137, 1
        %s457 = scalar_lea.sflag [#allocation3], %s456
        %s458 = sand.u32 %s137, 1
        %s459 = smul.addr %s458, 16
        %s460 = scalar_lea.vmem [#allocation2], %s459
        // Predicated region
        $region41: #{tpu_custom_call.1} parent=39 // pred_check
          %p461 = pneg %p147
        $region42: #{tpu_custom_call.1} parent=39 // pred_check_branch
          %463 = sbr.rel (%p461) target = $region44
        $region43: #{tpu_custom_call.1} parent=39 // pred_region
          %s464 = smul.u32 2, %s19
          %s466 = ssub.s32 256, 256
          %467 = vsyncadd %s457, %s466
          %s468 = smul.addr %s464, 128
          %s469 = scalar_lea.hbm %s5, %s468
          %s470 = sshll.u32 %s460, 4
          %s471 = int_to_ptr.vmem [resolvable:$true] %s470
          %476 = dma.vmem_to_hbm [thread:$0]  %s471, 256, %s469, %s457, 128, 128, 8
        $region44: #{tpu_custom_call.1} parent=39 // pred_fallthru
          _
      $region40: #{tpu_custom_call.1} parent=5 // pred_fallthru
        _
      %p477 = scmp.le.s32.totalorder 2, %s14
      // Predicated region
      $region45: #{tpu_custom_call.1} parent=5 // pred_check
        %p478 = pneg %p477
      $region46: #{tpu_custom_call.1} parent=5 // pred_check_branch
        %480 = sbr.rel (%p478) target = $region48
      $region47: #{tpu_custom_call.1} parent=5 // pred_region
        %s481 = ssub.s32 %s14, 2
        // Predicated region
        $region49: #{tpu_custom_call.1} parent=47 // pred_check
          %p482 = pneg %p153
        $region50: #{tpu_custom_call.1} parent=47 // pred_check_branch
          %484 = sbr.rel (%p482) target = $region52
        $region51: #{tpu_custom_call.1} parent=47 // pred_region
          %s485 = sand.u32 %s138, 1
          %s486 = scalar_lea.sflag [#allocation3], %s485
          %s487 = sand.u32 %s138, 1
          %s488 = smul.addr %s487, 16
          %s489 = scalar_lea.vmem [#allocation2], %s488
          %490 = dma.done %s486, 256
        $region52: #{tpu_custom_call.1} parent=47 // pred_fallthru
          _
      $region48: #{tpu_custom_call.1} parent=5 // pred_fallthru
        _
    $region6: #{tpu_custom_call.1} parent=1 // loop_footer
      %s18 = sadd.s32 1, %s14
    $region7: #{tpu_custom_call.1} parent=1 // loop_footer_branch
      %13 = sbr.rel target = $region3
    $region8: #{tpu_custom_call.1} parent=1 // loop_exit
      _
    %491 = vsyncpa [#allocation3], 1
    %s492 = scalar_lea.sflag [#allocation3], 1
    %493 = vsyncpa %s492, 1

</llo_original>
